<compile_context>
chip_gen: v5e
topology: v5e:2x2
jax: 0.10.0
libtpu: 0.0.40
codegen_flags: <defaults>
</compile_context>

<pallas_src>
import functools

import jax
import jax.numpy as jnp
from jax.experimental import pallas as pl
from jax.experimental.pallas import tpu as pltpu

NEG_SLOPE = 0.01  # nn.LeakyReLU default negative slope


def _vmem():
    return pl.BlockSpec(memory_space=pltpu.MemorySpace.VMEM)


def _leaky(x):
    return jnp.where(x > 0, x, NEG_SLOPE * x)


def _vmem_limit_bytes():
    """Generation-aware VMEM budget, leaving headroom for compiler scratch.

    v7x (64 MiB/TC) -> ~56 MiB, v5e/v6e (128 MiB) -> ~120 MiB.
    Falls back to a v7x-safe 56 MiB if the hardware query is unavailable.
    """
    try:
        cap = int(pltpu.get_tpu_info().vmem_capacity_bytes)
    except Exception:
        cap = 64 * 1024 * 1024
    return max(cap - 8 * 1024 * 1024, 32 * 1024 * 1024)


# ---------------------------------------------------------------------------
# Fused kernel: RW_NN core + mlp + proj_head + predictor
# ---------------------------------------------------------------------------
def _seqgraph_kernel(poi_ref, fc_wT_ref, fc_b_ref,
                     z0_ref, adjh_ref, a_hbm_ref, bm_ref,
                     mlp_wT_ref, mlp_b_ref, tar_ref,
                     pred_w1sT_ref, pred_w1tT_ref, pred_b1_ref, pred_w2T_ref,
                     proj_w1T_ref, proj_b1_ref, proj_w2T_ref, head_b_ref,
                     o_ref, a_vmem, a_sem, *, max_step, H, S, D):
    f32, bf16 = jnp.float32, jnp.bfloat16

    # Kick off the HBM->VMEM DMA of the dense adjacency A (largest operand) and
    # hide it behind all the A-independent work below.
    need_a = max_step > 1
    if need_a:
        a_copy = pltpu.make_async_copy(a_hbm_ref, a_vmem, a_sem)
        a_copy.start()

    # ---- RW_NN: x = sigmoid(fc(poi_feat))  (weights pre-transposed (in,out)) -
    x = jax.nn.sigmoid(
        jnp.dot(poi_ref[...].astype(f32), fc_wT_ref[...],
                preferred_element_type=f32) + fc_b_ref[...])         # (N, D) f32
    x_bf = x.astype(bf16)                                            # cast once per step

    z_bf = z0_ref[...]                                               # (H*S, D) bf16, flat
    adjh = adjh_ref[...]                                             # (H*S, H*S) bf16 block-diag
    Bm = bm_ref[...]                                                 # (N, G) bf16

    def z_xT(zb, xb):
        # (H*S, D) @ (N, D)^T -> (H*S, N); bf16 MXU feed, f32 accumulation.
        return jax.lax.dot_general(zb, xb, (((1,), (1,)), ((), ())),
                                   preferred_element_type=f32)

    zx = z_xT(z_bf, x_bf)                                            # (H*S, N), step-invariant
    N = zx.shape[1]

    def pool(t):
        # S-reduction on VPU/XLU slots (MXU stays free), then graph pooling matmul.
        r = (zx * t).reshape(H, S, N).sum(axis=1)                    # (H, N) f32
        return jnp.dot(r.astype(bf16), Bm, preferred_element_type=f32)   # (H, G)

    def mlp_slice(pooled, i):
        # mlp folded into the step loop: sess = sum_i pooled_i^T @ W^T[iH:(i+1)H].
        w = mlp_wT_ref[i]                                            # (H, D), aligned leading-axis index
        return jax.lax.dot_general(pooled, w, (((0,), (0,)), ((), ())),
                                   preferred_element_type=f32)       # (G, D)

    # step 0: eye @ z == z  =>  t == zx
    sess = mlp_slice(pool(zx), 0)                                    # (G, D)

    if need_a:
        a_copy.wait()
        A = a_vmem[...]                                              # (N, N) bf16

    # TODO(synk): convert to lax.fori_loop(unroll=True) carrying (x_bf, z_bf, sess)
    # if max_step grows beyond ~4 (the (max_step, H, D) mlp layout already allows it).
    for i in range(1, max_step):
        # TODO(synk): training-mode dropout on t not modeled (identity in eval).
        # MessagePassing propagate (add aggregation) as dense adjacency matmul.
        x_bf = jnp.dot(A, x_bf, preferred_element_type=f32).astype(bf16)     # (N, D)
        # All H hidden graphs in one block-diagonal matmul (fine while H*S <= one MXU tile).
        z_bf = jnp.dot(adjh, z_bf, preferred_element_type=f32).astype(bf16)  # (H*S, D)
        sess = sess + mlp_slice(pool(z_xT(z_bf, x_bf)), i)

    sess = _leaky(sess + mlp_b_ref[...])                             # (G, D)  sess_feat

    # ---- heads fused into one lane-dense (G, out_pad) slab -------------------
    #   cols [0:D]  = proj_head(sess)        (Linear + LeakyReLU + Linear)
    #   col  [D]    = predictor logits       (Linear(2D->D) + LeakyReLU + Linear(D->1))
    #   cols [D+1:] = 0
    # The second linears are zero-padded / column-placed in the wrapper so one
    # matmul-sum produces the packed slab -> single unmasked full-width store.
    tar = tar_ref[...].astype(f32)                                   # (G, D)
    h = _leaky(jnp.dot(sess, pred_w1sT_ref[...], preferred_element_type=f32)
               + jnp.dot(tar, pred_w1tT_ref[...], preferred_element_type=f32)
               + pred_b1_ref[...])                                   # (G, D)
    p1 = _leaky(jnp.dot(sess, proj_w1T_ref[...], preferred_element_type=f32)
                + proj_b1_ref[...])                                  # (G, D)
    packed = (jnp.dot(p1, proj_w2T_ref[...], preferred_element_type=f32)
              + jnp.dot(h, pred_w2T_ref[...], preferred_element_type=f32)
              + head_b_ref[...])                                     # (G, out_pad)
    o_ref[...] = packed


# ---------------------------------------------------------------------------
# Parameter initialization (deterministic, xavier_normal-style)
# ---------------------------------------------------------------------------
def xavier_normal(key, shape):
    if len(shape) == 2:
        fan_out, fan_in = shape
    else:
        receptive = 1
        for s in shape[2:]:
            receptive *= s
        fan_in, fan_out = shape[1] * receptive, shape[0] * receptive
    std = (2.0 / (fan_in + fan_out)) ** 0.5
    return std * jax.random.normal(key, shape, dtype=jnp.float32)


def init_params(key, n_poi, D, max_step, H, S):
    ks = jax.random.split(key, 16)
    p = {}
    p["poi_embed"] = xavier_normal(ks[0], (n_poi, D))
    # RW_NN
    p["fc_w"] = xavier_normal(ks[1], (D, D))
    p["fc_b"] = 0.01 * jax.random.normal(ks[2], (D,), dtype=jnp.float32)
    p["hid_adj"] = xavier_normal(ks[3], (H, S * (S - 1) // 2))
    p["hid_feat"] = xavier_normal(ks[4], (H, S, D))
    p["mlp_w"] = xavier_normal(ks[5], (D, H * max_step))
    p["mlp_b"] = 0.01 * jax.random.normal(ks[6], (D,), dtype=jnp.float32)
    # proj_head
    p["proj_w1"] = xavier_normal(ks[7], (D, D))
    p["proj_b1"] = 0.01 * jax.random.normal(ks[8], (D,), dtype=jnp.float32)
    p["proj_w2"] = xavier_normal(ks[9], (D, D))
    p["proj_b2"] = 0.01 * jax.random.normal(ks[10], (D,), dtype=jnp.float32)
    # predictor
    p["pred_w1"] = xavier_normal(ks[11], (D, 2 * D))
    p["pred_b1"] = 0.01 * jax.random.normal(ks[12], (D,), dtype=jnp.float32)
    p["pred_w2"] = xavier_normal(ks[13], (1, D))
    p["pred_b2"] = 0.01 * jax.random.normal(ks[14], (1,), dtype=jnp.float32)
    return p


# ---------------------------------------------------------------------------
# SeqGraph forward (glue in plain JAX, hot path in ONE fused Pallas kernel)
# ---------------------------------------------------------------------------
def seq_graph_forward(params, data_x, edge_index, batch, tar_poi,
                      *, max_step, H, S, n_graphs):
    D = params["poi_embed"].shape[1]
    N = data_x.shape[0]
    G = n_graphs

    # embedding lookups (plain JAX gathers); bf16 halves their HBM->VMEM bytes
    poi_feat = params["poi_embed"][data_x].astype(jnp.bfloat16)      # (N, D)
    tar_embed = params["poi_embed"][tar_poi].astype(jnp.bfloat16)    # (G, D)

    # hidden adjacency: LeakyReLU, upper-triangular fill, symmetrize, block-diag
    iu0, iu1 = jnp.triu_indices(S, k=1)
    ha = _leaky(params["hid_adj"])
    adjh = jnp.zeros((H, S, S), jnp.float32).at[:, iu0, iu1].set(ha)
    adjh = adjh + jnp.swapaxes(adjh, 1, 2)
    adjh_bd = jnp.zeros((H, S, H, S), jnp.float32)
    adjh_bd = adjh_bd.at[jnp.arange(H), :, jnp.arange(H), :].set(adjh)
    adjh_bd = adjh_bd.reshape(H * S, H * S).astype(jnp.bfloat16)
    # TODO(synk): once H*S exceeds one MXU tile (128 on v5e, 256 on v6e/v7x),
    # switch the z update to a batched per-graph contraction instead of block-diag.

    # dense message-passing adjacency (source_to_target, add aggregation), bf16
    # TODO(synk): for large N replace with a scalar-prefetched sparse
    # gather/segment-add (PrefetchScalarGridSpec) or a row-tiled BlockSpec grid
    # over A (row axis 'parallel' to use v7x's 2 TensorCores) instead of
    # whole-array residency; dense propagate is the VMEM/FLOP cliff as N grows.
    A = jnp.zeros((N, N), jnp.float32).at[edge_index[1], edge_index[0]].add(1.0)
    A = A.astype(jnp.bfloat16)
    Bm = jax.nn.one_hot(batch, G, dtype=jnp.bfloat16)                # (N, G)

    # step-major (max_step, H, D) layout -> tile-aligned per-step indexing
    mlp_wT = params["mlp_w"].T.reshape(max_step, H, D)

    pred_w1T = params["pred_w1"].T                                   # (2D, D)
    pred_w1sT, pred_w1tT = pred_w1T[:D], pred_w1T[D:]

    # lane-dense packed output slab: cols [0:D]=proj, col [D]=pred, rest zero.
    out_pad = ((D + 1 + 127) // 128) * 128
    proj_w2T_pad = jnp.zeros((D, out_pad), jnp.float32).at[:, :D].set(params["proj_w2"].T)
    pred_w2T_pad = jnp.zeros((D, out_pad), jnp.float32).at[:, D].set(params["pred_w2"][0])
    head_b = (jnp.zeros((1, out_pad), jnp.float32)
              .at[0, :D].set(params["proj_b2"])
              .at[0, D].set(params["pred_b2"][0]))

    kern = functools.partial(_seqgraph_kernel, max_step=max_step, H=H, S=S, D=D)
    in_specs = [_vmem()] * 18
    in_specs[5] = pl.BlockSpec(memory_space=pl.ANY)    # A stays in HBM; manual DMA

    out = pl.pallas_call(
        kern,
        out_shape=jax.ShapeDtypeStruct((G, out_pad), jnp.float32),
        in_specs=in_specs,
        out_specs=_vmem(),
        scratch_shapes=[pltpu.VMEM((N, N), jnp.bfloat16),   # A landing buffer
                        pltpu.SemaphoreType.DMA],
        compiler_params=pltpu.CompilerParams(vmem_limit_bytes=_vmem_limit_bytes()),
    )(poi_feat,
      params["fc_w"].T, params["fc_b"].reshape(1, -1),
      params["hid_feat"].reshape(H * S, D).astype(jnp.bfloat16),
      adjh_bd, A, Bm,
      mlp_wT, params["mlp_b"].reshape(1, -1),
      tar_embed,
      pred_w1sT, pred_w1tT, params["pred_b1"].reshape(1, -1), pred_w2T_pad,
      params["proj_w1"].T, params["proj_b1"].reshape(1, -1), proj_w2T_pad,
      head_b)

    proj = out[:, :D]                                                # (G, D)
    pred_logits = out[:, D:D + 1]                                    # (G, 1)
    return proj, pred_logits


if __name__ == "__main__":
    # small, module-consistent shapes
    n_poi, D = 64, 32
    max_step, H, S = 3, 4, 8          # max_step, hid_graph_num, hid_graph_size
    N, G, E = 16, 4, 24               # nodes, graphs, edges

    key = jax.random.PRNGKey(0)
    k_par, k_x, k_e, k_t = jax.random.split(key, 4)

    params = init_params(k_par, n_poi, D, max_step, H, S)

    data_x = jax.random.randint(k_x, (N,), 0, n_poi, dtype=jnp.int32)        # node POI ids
    edge_index = jax.random.randint(k_e, (2, E), 0, N, dtype=jnp.int32)      # (2, E)
    batch = jnp.repeat(jnp.arange(G, dtype=jnp.int32), N // G)               # graph indicator
    tar_poi = jax.random.randint(k_t, (G,), 0, n_poi, dtype=jnp.int32)       # target POIs

    proj, pred_logits = seq_graph_forward(
        params, data_x, edge_index, batch, tar_poi,
        max_step=max_step, H=H, S=S, n_graphs=G,
    )
    jax.block_until_ready((proj, pred_logits))

    assert proj.shape == (G, D)
    assert pred_logits.shape == (G, 1)
    print("KERNEL_OK")
</pallas_src>

<mosaic_0001>
module attributes {stable_mosaic.version = 11 : i64} {
  func.func @_seqgraph_kernel(%arg0: memref<16x32xbf16, #tpu.memory_space<vmem>>, %arg1: memref<32x32xf32, #tpu.memory_space<vmem>>, %arg2: memref<1x32xf32, #tpu.memory_space<vmem>>, %arg3: memref<32x32xbf16, #tpu.memory_space<vmem>>, %arg4: memref<32x32xbf16, #tpu.memory_space<vmem>>, %arg5: memref<16x16xbf16, #tpu.memory_space<any>>, %arg6: memref<16x4xbf16, #tpu.memory_space<vmem>>, %arg7: memref<3x4x32xf32, #tpu.memory_space<vmem>>, %arg8: memref<1x32xf32, #tpu.memory_space<vmem>>, %arg9: memref<4x32xbf16, #tpu.memory_space<vmem>>, %arg10: memref<32x32xf32, #tpu.memory_space<vmem>>, %arg11: memref<32x32xf32, #tpu.memory_space<vmem>>, %arg12: memref<1x32xf32, #tpu.memory_space<vmem>>, %arg13: memref<32x128xf32, #tpu.memory_space<vmem>>, %arg14: memref<32x32xf32, #tpu.memory_space<vmem>>, %arg15: memref<1x32xf32, #tpu.memory_space<vmem>>, %arg16: memref<32x128xf32, #tpu.memory_space<vmem>>, %arg17: memref<1x128xf32, #tpu.memory_space<vmem>>, %arg18: memref<4x128xf32, #tpu.memory_space<vmem>>, %arg19: memref<16x16xbf16, #tpu.memory_space<vmem>>, %arg20: memref<!tpu.dma_semaphore, #tpu.memory_space<semaphore_mem>>) attributes {dimension_semantics = [], scalar_prefetch = 0 : i64, scratch_operands = 2 : i64, tpu.core_type = #tpu.core_type<tc>} {
    tpu.enqueue_dma source(%arg5 : memref<16x16xbf16, #tpu.memory_space<any>>) target(%arg19 : memref<16x16xbf16, #tpu.memory_space<vmem>>) target_semaphore(%arg20 : memref<!tpu.dma_semaphore, #tpu.memory_space<semaphore_mem>>)
    %c0 = arith.constant 0 : index
    %c0_0 = arith.constant 0 : index
    %0 = vector.load %arg0[%c0, %c0_0] : memref<16x32xbf16, #tpu.memory_space<vmem>>, vector<16x32xbf16>
    %1 = arith.extf %0 : vector<16x32xbf16> to vector<16x32xf32>
    %c0_1 = arith.constant 0 : index
    %c0_2 = arith.constant 0 : index
    %2 = vector.load %arg1[%c0_1, %c0_2] : memref<32x32xf32, #tpu.memory_space<vmem>>, vector<32x32xf32>
    %cst = arith.constant dense<0.000000e+00> : vector<16x32xf32>
    %3 = tpu.matmul %1, %2, %cst {dimension_numbers = #tpu.dot_dimension_numbers<[1], [0], [0], [1], [0, 0, 1, 1], [], []>} : vector<16x32xf32>, vector<32x32xf32>, vector<16x32xf32> -> vector<16x32xf32>
    %c0_3 = arith.constant 0 : index
    %c0_4 = arith.constant 0 : index
    %4 = vector.load %arg2[%c0_3, %c0_4] : memref<1x32xf32, #tpu.memory_space<vmem>>, vector<1x32xf32>
    %5 = vector.broadcast %4 : vector<1x32xf32> to vector<16x32xf32>
    %6 = arith.addf %3, %5 : vector<16x32xf32>
    %7 = arith.negf %6 : vector<16x32xf32>
    %8 = math.exp %7 : vector<16x32xf32>
    %cst_5 = arith.constant 1.000000e+00 : f32
    %9 = vector.broadcast %cst_5 : f32 to vector<16x32xf32>
    %10 = arith.addf %9, %8 : vector<16x32xf32>
    %11 = arith.divf %9, %10 : vector<16x32xf32>
    %12 = arith.truncf %11 : vector<16x32xf32> to vector<16x32xbf16>
    %c0_6 = arith.constant 0 : index
    %c0_7 = arith.constant 0 : index
    %13 = vector.load %arg3[%c0_6, %c0_7] : memref<32x32xbf16, #tpu.memory_space<vmem>>, vector<32x32xbf16>
    %c0_8 = arith.constant 0 : index
    %c0_9 = arith.constant 0 : index
    %14 = vector.load %arg4[%c0_8, %c0_9] : memref<32x32xbf16, #tpu.memory_space<vmem>>, vector<32x32xbf16>
    %c0_10 = arith.constant 0 : index
    %c0_11 = arith.constant 0 : index
    %15 = vector.load %arg6[%c0_10, %c0_11] : memref<16x4xbf16, #tpu.memory_space<vmem>>, vector<16x4xbf16>
    %cst_12 = arith.constant dense<0.000000e+00> : vector<32x16xf32>
    %16 = tpu.matmul %13, %12, %cst_12 {dimension_numbers = #tpu.dot_dimension_numbers<[1], [1], [0], [0], [0, 0, 1, 0], [], []>} : vector<32x32xbf16>, vector<16x32xbf16>, vector<32x16xf32> -> vector<32x16xf32>
    %17 = arith.mulf %16, %16 : vector<32x16xf32>
    %18 = vector.shape_cast %17 : vector<32x16xf32> to vector<4x8x16xf32>
    %cst_13 = arith.constant dense<0.000000e+00> : vector<4x16xf32>
    %19 = vector.multi_reduction <add>, %18, %cst_13 [1] : vector<4x8x16xf32> to vector<4x16xf32>
    %20 = arith.truncf %19 : vector<4x16xf32> to vector<4x16xbf16>
    %cst_14 = arith.constant dense<0.000000e+00> : vector<4x4xf32>
    %21 = tpu.matmul %20, %15, %cst_14 {dimension_numbers = #tpu.dot_dimension_numbers<[1], [0], [0], [1], [0, 0, 1, 1], [], []>} : vector<4x16xbf16>, vector<16x4xbf16>, vector<4x4xf32> -> vector<4x4xf32>
    %c0_15 = arith.constant 0 : index
    %c0_16 = arith.constant 0 : index
    %c0_17 = arith.constant 0 : index
    %22 = vector.load %arg7[%c0_15, %c0_16, %c0_17] : memref<3x4x32xf32, #tpu.memory_space<vmem>>, vector<1x4x32xf32>
    %23 = vector.shape_cast %22 : vector<1x4x32xf32> to vector<4x32xf32>
    %cst_18 = arith.constant dense<0.000000e+00> : vector<4x32xf32>
    %24 = tpu.matmul %21, %23, %cst_18 {dimension_numbers = #tpu.dot_dimension_numbers<[0], [0], [1], [1], [0, 1, 1, 1], [], []>} : vector<4x4xf32>, vector<4x32xf32>, vector<4x32xf32> -> vector<4x32xf32>
    tpu.wait_dma2 semaphore(%arg20 : memref<!tpu.dma_semaphore, #tpu.memory_space<semaphore_mem>>) src(%arg5 : memref<16x16xbf16, #tpu.memory_space<any>>) dst(%arg19 : memref<16x16xbf16, #tpu.memory_space<vmem>>)
    %c0_19 = arith.constant 0 : index
    %c0_20 = arith.constant 0 : index
    %25 = vector.load %arg19[%c0_19, %c0_20] : memref<16x16xbf16, #tpu.memory_space<vmem>>, vector<16x16xbf16>
    %cst_21 = arith.constant dense<0.000000e+00> : vector<16x32xf32>
    %26 = tpu.matmul %25, %12, %cst_21 {dimension_numbers = #tpu.dot_dimension_numbers<[1], [0], [0], [1], [0, 0, 1, 1], [], []>} : vector<16x16xbf16>, vector<16x32xbf16>, vector<16x32xf32> -> vector<16x32xf32>
    %27 = arith.truncf %26 : vector<16x32xf32> to vector<16x32xbf16>
    %cst_22 = arith.constant dense<0.000000e+00> : vector<32x32xf32>
    %28 = tpu.matmul %14, %13, %cst_22 {dimension_numbers = #tpu.dot_dimension_numbers<[1], [0], [0], [1], [0, 0, 1, 1], [], []>} : vector<32x32xbf16>, vector<32x32xbf16>, vector<32x32xf32> -> vector<32x32xf32>
    %29 = arith.truncf %28 : vector<32x32xf32> to vector<32x32xbf16>
    %cst_23 = arith.constant dense<0.000000e+00> : vector<32x16xf32>
    %30 = tpu.matmul %29, %27, %cst_23 {dimension_numbers = #tpu.dot_dimension_numbers<[1], [1], [0], [0], [0, 0, 1, 0], [], []>} : vector<32x32xbf16>, vector<16x32xbf16>, vector<32x16xf32> -> vector<32x16xf32>
    %31 = arith.mulf %16, %30 : vector<32x16xf32>
    %32 = vector.shape_cast %31 : vector<32x16xf32> to vector<4x8x16xf32>
    %cst_24 = arith.constant dense<0.000000e+00> : vector<4x16xf32>
    %33 = vector.multi_reduction <add>, %32, %cst_24 [1] : vector<4x8x16xf32> to vector<4x16xf32>
    %34 = arith.truncf %33 : vector<4x16xf32> to vector<4x16xbf16>
    %cst_25 = arith.constant dense<0.000000e+00> : vector<4x4xf32>
    %35 = tpu.matmul %34, %15, %cst_25 {dimension_numbers = #tpu.dot_dimension_numbers<[1], [0], [0], [1], [0, 0, 1, 1], [], []>} : vector<4x16xbf16>, vector<16x4xbf16>, vector<4x4xf32> -> vector<4x4xf32>
    %c1 = arith.constant 1 : index
    %c0_26 = arith.constant 0 : index
    %c0_27 = arith.constant 0 : index
    %36 = vector.load %arg7[%c1, %c0_26, %c0_27] : memref<3x4x32xf32, #tpu.memory_space<vmem>>, vector<1x4x32xf32>
    %37 = vector.shape_cast %36 : vector<1x4x32xf32> to vector<4x32xf32>
    %cst_28 = arith.constant dense<0.000000e+00> : vector<4x32xf32>
    %38 = tpu.matmul %35, %37, %cst_28 {dimension_numbers = #tpu.dot_dimension_numbers<[0], [0], [1], [1], [0, 1, 1, 1], [], []>} : vector<4x4xf32>, vector<4x32xf32>, vector<4x32xf32> -> vector<4x32xf32>
    %39 = arith.addf %24, %38 : vector<4x32xf32>
    %cst_29 = arith.constant dense<0.000000e+00> : vector<16x32xf32>
    %40 = tpu.matmul %25, %27, %cst_29 {dimension_numbers = #tpu.dot_dimension_numbers<[1], [0], [0], [1], [0, 0, 1, 1], [], []>} : vector<16x16xbf16>, vector<16x32xbf16>, vector<16x32xf32> -> vector<16x32xf32>
    %41 = arith.truncf %40 : vector<16x32xf32> to vector<16x32xbf16>
    %cst_30 = arith.constant dense<0.000000e+00> : vector<32x32xf32>
    %42 = tpu.matmul %14, %29, %cst_30 {dimension_numbers = #tpu.dot_dimension_numbers<[1], [0], [0], [1], [0, 0, 1, 1], [], []>} : vector<32x32xbf16>, vector<32x32xbf16>, vector<32x32xf32> -> vector<32x32xf32>
    %43 = arith.truncf %42 : vector<32x32xf32> to vector<32x32xbf16>
    %cst_31 = arith.constant dense<0.000000e+00> : vector<32x16xf32>
    %44 = tpu.matmul %43, %41, %cst_31 {dimension_numbers = #tpu.dot_dimension_numbers<[1], [1], [0], [0], [0, 0, 1, 0], [], []>} : vector<32x32xbf16>, vector<16x32xbf16>, vector<32x16xf32> -> vector<32x16xf32>
    %45 = arith.mulf %16, %44 : vector<32x16xf32>
    %46 = vector.shape_cast %45 : vector<32x16xf32> to vector<4x8x16xf32>
    %cst_32 = arith.constant dense<0.000000e+00> : vector<4x16xf32>
    %47 = vector.multi_reduction <add>, %46, %cst_32 [1] : vector<4x8x16xf32> to vector<4x16xf32>
    %48 = arith.truncf %47 : vector<4x16xf32> to vector<4x16xbf16>
    %cst_33 = arith.constant dense<0.000000e+00> : vector<4x4xf32>
    %49 = tpu.matmul %48, %15, %cst_33 {dimension_numbers = #tpu.dot_dimension_numbers<[1], [0], [0], [1], [0, 0, 1, 1], [], []>} : vector<4x16xbf16>, vector<16x4xbf16>, vector<4x4xf32> -> vector<4x4xf32>
    %c2 = arith.constant 2 : index
    %c0_34 = arith.constant 0 : index
    %c0_35 = arith.constant 0 : index
    %50 = vector.load %arg7[%c2, %c0_34, %c0_35] : memref<3x4x32xf32, #tpu.memory_space<vmem>>, vector<1x4x32xf32>
    %51 = vector.shape_cast %50 : vector<1x4x32xf32> to vector<4x32xf32>
    %cst_36 = arith.constant dense<0.000000e+00> : vector<4x32xf32>
    %52 = tpu.matmul %49, %51, %cst_36 {dimension_numbers = #tpu.dot_dimension_numbers<[0], [0], [1], [1], [0, 1, 1, 1], [], []>} : vector<4x4xf32>, vector<4x32xf32>, vector<4x32xf32> -> vector<4x32xf32>
    %53 = arith.addf %39, %52 : vector<4x32xf32>
    %c0_37 = arith.constant 0 : index
    %c0_38 = arith.constant 0 : index
    %54 = vector.load %arg8[%c0_37, %c0_38] : memref<1x32xf32, #tpu.memory_space<vmem>>, vector<1x32xf32>
    %55 = vector.broadcast %54 : vector<1x32xf32> to vector<4x32xf32>
    %56 = arith.addf %53, %55 : vector<4x32xf32>
    %cst_39 = arith.constant 0.000000e+00 : f32
    %57 = vector.broadcast %cst_39 : f32 to vector<4x32xf32>
    %58 = arith.cmpf ogt, %56, %57 : vector<4x32xf32>
    %cst_40 = arith.constant 0.00999999977 : f32
    %59 = vector.broadcast %cst_40 : f32 to vector<4x32xf32>
    %60 = arith.mulf %59, %56 : vector<4x32xf32>
    %61 = arith.select %58, %56, %60 : vector<4x32xi1>, vector<4x32xf32>
    %c0_41 = arith.constant 0 : index
    %c0_42 = arith.constant 0 : index
    %62 = vector.load %arg9[%c0_41, %c0_42] : memref<4x32xbf16, #tpu.memory_space<vmem>>, vector<4x32xbf16>
    %63 = arith.extf %62 : vector<4x32xbf16> to vector<4x32xf32>
    %c0_43 = arith.constant 0 : index
    %c0_44 = arith.constant 0 : index
    %64 = vector.load %arg10[%c0_43, %c0_44] : memref<32x32xf32, #tpu.memory_space<vmem>>, vector<32x32xf32>
    %cst_45 = arith.constant dense<0.000000e+00> : vector<4x32xf32>
    %65 = tpu.matmul %61, %64, %cst_45 {dimension_numbers = #tpu.dot_dimension_numbers<[1], [0], [0], [1], [0, 0, 1, 1], [], []>} : vector<4x32xf32>, vector<32x32xf32>, vector<4x32xf32> -> vector<4x32xf32>
    %c0_46 = arith.constant 0 : index
    %c0_47 = arith.constant 0 : index
    %66 = vector.load %arg11[%c0_46, %c0_47] : memref<32x32xf32, #tpu.memory_space<vmem>>, vector<32x32xf32>
    %cst_48 = arith.constant dense<0.000000e+00> : vector<4x32xf32>
    %67 = tpu.matmul %63, %66, %cst_48 {dimension_numbers = #tpu.dot_dimension_numbers<[1], [0], [0], [1], [0, 0, 1, 1], [], []>} : vector<4x32xf32>, vector<32x32xf32>, vector<4x32xf32> -> vector<4x32xf32>
    %68 = arith.addf %65, %67 : vector<4x32xf32>
    %c0_49 = arith.constant 0 : index
    %c0_50 = arith.constant 0 : index
    %69 = vector.load %arg12[%c0_49, %c0_50] : memref<1x32xf32, #tpu.memory_space<vmem>>, vector<1x32xf32>
    %70 = vector.broadcast %69 : vector<1x32xf32> to vector<4x32xf32>
    %71 = arith.addf %68, %70 : vector<4x32xf32>
    %cst_51 = arith.constant 0.000000e+00 : f32
    %72 = vector.broadcast %cst_51 : f32 to vector<4x32xf32>
    %73 = arith.cmpf ogt, %71, %72 : vector<4x32xf32>
    %cst_52 = arith.constant 0.00999999977 : f32
    %74 = vector.broadcast %cst_52 : f32 to vector<4x32xf32>
    %75 = arith.mulf %74, %71 : vector<4x32xf32>
    %76 = arith.select %73, %71, %75 : vector<4x32xi1>, vector<4x32xf32>
    %c0_53 = arith.constant 0 : index
    %c0_54 = arith.constant 0 : index
    %77 = vector.load %arg14[%c0_53, %c0_54] : memref<32x32xf32, #tpu.memory_space<vmem>>, vector<32x32xf32>
    %cst_55 = arith.constant dense<0.000000e+00> : vector<4x32xf32>
    %78 = tpu.matmul %61, %77, %cst_55 {dimension_numbers = #tpu.dot_dimension_numbers<[1], [0], [0], [1], [0, 0, 1, 1], [], []>} : vector<4x32xf32>, vector<32x32xf32>, vector<4x32xf32> -> vector<4x32xf32>
    %c0_56 = arith.constant 0 : index
    %c0_57 = arith.constant 0 : index
    %79 = vector.load %arg15[%c0_56, %c0_57] : memref<1x32xf32, #tpu.memory_space<vmem>>, vector<1x32xf32>
    %80 = vector.broadcast %79 : vector<1x32xf32> to vector<4x32xf32>
    %81 = arith.addf %78, %80 : vector<4x32xf32>
    %cst_58 = arith.constant 0.000000e+00 : f32
    %82 = vector.broadcast %cst_58 : f32 to vector<4x32xf32>
    %83 = arith.cmpf ogt, %81, %82 : vector<4x32xf32>
    %cst_59 = arith.constant 0.00999999977 : f32
    %84 = vector.broadcast %cst_59 : f32 to vector<4x32xf32>
    %85 = arith.mulf %84, %81 : vector<4x32xf32>
    %86 = arith.select %83, %81, %85 : vector<4x32xi1>, vector<4x32xf32>
    %c0_60 = arith.constant 0 : index
    %c0_61 = arith.constant 0 : index
    %87 = vector.load %arg16[%c0_60, %c0_61] : memref<32x128xf32, #tpu.memory_space<vmem>>, vector<32x128xf32>
    %cst_62 = arith.constant dense<0.000000e+00> : vector<4x128xf32>
    %88 = tpu.matmul %86, %87, %cst_62 {dimension_numbers = #tpu.dot_dimension_numbers<[1], [0], [0], [1], [0, 0, 1, 1], [], []>} : vector<4x32xf32>, vector<32x128xf32>, vector<4x128xf32> -> vector<4x128xf32>
    %c0_63 = arith.constant 0 : index
    %c0_64 = arith.constant 0 : index
    %89 = vector.load %arg13[%c0_63, %c0_64] : memref<32x128xf32, #tpu.memory_space<vmem>>, vector<32x128xf32>
    %cst_65 = arith.constant dense<0.000000e+00> : vector<4x128xf32>
    %90 = tpu.matmul %76, %89, %cst_65 {dimension_numbers = #tpu.dot_dimension_numbers<[1], [0], [0], [1], [0, 0, 1, 1], [], []>} : vector<4x32xf32>, vector<32x128xf32>, vector<4x128xf32> -> vector<4x128xf32>
    %91 = arith.addf %88, %90 : vector<4x128xf32>
    %c0_66 = arith.constant 0 : index
    %c0_67 = arith.constant 0 : index
    %92 = vector.load %arg17[%c0_66, %c0_67] : memref<1x128xf32, #tpu.memory_space<vmem>>, vector<1x128xf32>
    %93 = vector.broadcast %92 : vector<1x128xf32> to vector<4x128xf32>
    %94 = arith.addf %91, %93 : vector<4x128xf32>
    %c0_68 = arith.constant 0 : index
    %c0_69 = arith.constant 0 : index
    %95 = vector.load %arg18[%c0_68, %c0_69] : memref<4x128xf32, #tpu.memory_space<vmem>>, vector<4x128xf32>
    tpu.vector_store %arg18[%c0_68, %c0_69], %94 {strides = array<i32>} : memref<4x128xf32, #tpu.memory_space<vmem>>, vector<4x128xf32>,
    return
  }
}

</mosaic_0001>

<llo_original>
// kernel: tpu_custom_call.1
$region0: #{tpu_custom_call.1}
  #allocation0 [shape = 'u32[]', space=smem, size = 0x4, offset = 0x4, fixed_abs, tag = 'smem constant byte address 0x4 - core index']
  #allocation1 [shape = 'u32[72,128]{1,0:T(1,128)}', space=vmem, size = 0x9000, scoped, tag = 'internal scratch']
  #allocation2 [shape = 'bf16[16,16]{1,0:T(8,128)(2,1)}', space=vmem, size = 0x1000, scoped, tag = 'scratch operand']
  #allocation3 [shape = 's32[1]{0}', space=sflag, size = 0x4, scoped, tag = 'scratch operand']
  #allocation20 [shape = 's32[]', space=sflag, size = 0x4, offset = 0, fixed_abs, tag = 'sflag constant byte address 0x0 - dummy sync flag']
  #allocation21 [shape = 's32[]', space=sflag, size = 0x4, offset = 0, fixed_abs, tag = 'sflag constant byte address 0x0 - dummy sync flag']
  #allocation22 [shape = 'u32[]', space=smem, size = 0x4, offset = 0x44, fixed_abs, tag = 'smem constant byte address 0x44 - assertion arg 0']
  #allocation23 [shape = 'u32[]', space=smem, size = 0x4, offset = 0x48, fixed_abs, tag = 'smem constant byte address 0x48 - assertion arg 1']
  %s0 = inlined_call_operand.vmem [shape: bf16[16,32], index: 0, kind: input, shape index: {}]
  %s1 = inlined_call_operand.hbm [shape: f32[32,32], index: 1, kind: input, shape index: {}]
  %s2 = inlined_call_operand.vmem [shape: f32[1,32], index: 2, kind: input, shape index: {}]
  %s3 = inlined_call_operand.hbm [shape: bf16[32,32], index: 3, kind: input, shape index: {}]
  %s4 = inlined_call_operand.hbm [shape: bf16[32,32], index: 4, kind: input, shape index: {}]
  %s5 = inlined_call_operand.hbm [shape: bf16[16,16], index: 5, kind: input, shape index: {}]
  %s6 = inlined_call_operand.vmem [shape: bf16[16,4], index: 6, kind: input, shape index: {}]
  %s7 = inlined_call_operand.hbm [shape: f32[3,4,32], index: 7, kind: input, shape index: {}]
  %s8 = inlined_call_operand.vmem [shape: f32[1,32], index: 8, kind: input, shape index: {}]
  %s9 = inlined_call_operand.vmem [shape: bf16[4,32], index: 9, kind: input, shape index: {}]
  %s10 = inlined_call_operand.hbm [shape: f32[32,32], index: 10, kind: input, shape index: {}]
  %s11 = inlined_call_operand.hbm [shape: f32[32,32], index: 11, kind: input, shape index: {}]
  %s12 = inlined_call_operand.vmem [shape: f32[1,32], index: 12, kind: input, shape index: {}]
  %s13 = inlined_call_operand.hbm [shape: f32[32,128], index: 13, kind: input, shape index: {}]
  %s14 = inlined_call_operand.hbm [shape: f32[32,32], index: 14, kind: input, shape index: {}]
  %s15 = inlined_call_operand.vmem [shape: f32[1,32], index: 15, kind: input, shape index: {}]
  %s16 = inlined_call_operand.hbm [shape: f32[32,128], index: 16, kind: input, shape index: {}]
  %s17 = inlined_call_operand.vmem [shape: f32[1,128], index: 17, kind: input, shape index: {}]
  %s18 = inlined_call_operand.hbm [shape: f32[4,128], index: 18, kind: output, shape index: {}]
  %s19 = sld [smem:[#allocation0]]
  $region118: #{tpu_custom_call.1} parent=0
    _
  %s21 = ssub.s32 1, %s19
  %s22 = scalar_select 0, %s21, %s19
  $region1: #{tpu_custom_call.1} parent=0
    #allocation4 [shape = 'u8[16384]{0}', space=vmem, size = 0x4000, scoped, tag = 'input window, operand 1, single buffered']
    #allocation5 [shape = 's32[1]{0}', space=sflag, size = 0x4, scoped, tag = 'scoped memory for tpu_custom_call.1']
    #allocation6 [shape = 's32[1]{0}', space=sflag, size = 0x4, scoped, tag = 'scoped memory for tpu_custom_call.1']
    #allocation7 [shape = 'u8[8192]{0}', space=vmem, size = 0x2000, scoped, tag = 'input window, operand 3, single buffered']
    #allocation8 [shape = 's32[1]{0}', space=sflag, size = 0x4, scoped, tag = 'scoped memory for tpu_custom_call.1']
    #allocation9 [shape = 'u8[8192]{0}', space=vmem, size = 0x2000, scoped, tag = 'input window, operand 4, single buffered']
    #allocation10 [shape = 'u8[6144]{0}', space=vmem, size = 0x1800, scoped, tag = 'input window, operand 7, single buffered']
    #allocation11 [shape = 's32[1]{0}', space=sflag, size = 0x4, scoped, tag = 'scoped memory for tpu_custom_call.1']
    #allocation12 [shape = 'u8[16384]{0}', space=vmem, size = 0x4000, scoped, tag = 'input window, operand 10, single buffered']
    #allocation13 [shape = 'u8[16384]{0}', space=vmem, size = 0x4000, scoped, tag = 'input window, operand 11, single buffered']
    #allocation14 [shape = 's32[1]{0}', space=sflag, size = 0x4, scoped, tag = 'scoped memory for tpu_custom_call.1']
    #allocation15 [shape = 'u8[16384]{0}', space=vmem, size = 0x4000, scoped, tag = 'input window, operand 13, single buffered']
    #allocation16 [shape = 'u8[16384]{0}', space=vmem, size = 0x4000, scoped, tag = 'input window, operand 14, single buffered']
    #allocation17 [shape = 's32[1]{0}', space=sflag, size = 0x4, scoped, tag = 'scoped memory for tpu_custom_call.1']
    #allocation18 [shape = 'u8[16384]{0}', space=vmem, size = 0x4000, scoped, tag = 'input window, operand 16, single buffered']
    #allocation19 [shape = 'u8[2048]{0}', space=vmem, size = 0x800, scoped, tag = 'output window, operand 0, single buffered']
    %23 = vsyncpa [#allocation5], 0
    %24 = vsyncpa [#allocation8], 0
    %25 = vsyncpa [#allocation11], 0
    %26 = vsyncpa [#allocation14], 0
    %27 = vsyncpa [#allocation17], 0
    %28 = vsyncpa [#allocation6], 0
    // Predicated region
    $region2: #{tpu_custom_call.1} parent=1 // pred_check
      _
    $region3: #{tpu_custom_call.1} parent=1 // pred_check_branch
      %30 = sbr.rel (0) target = $region5
    $region4: #{tpu_custom_call.1} parent=1 // pred_region
      _
    $region5: #{tpu_custom_call.1} parent=1 // pred_fallthru
      _
    // Predicated region
    $region6: #{tpu_custom_call.1} parent=1 // pred_check
      _
    $region7: #{tpu_custom_call.1} parent=1 // pred_check_branch
      %32 = sbr.rel (0) target = $region9
    $region8: #{tpu_custom_call.1} parent=1 // pred_region
      %34 = vsyncadd [#allocation5], 0
      %s35 = sshll.u32 %s1, 4
      %s36 = int_to_ptr.hbm [resolvable:$true] %s35
      %s37 = sshll.u32 [#allocation4], 4
      %s38 = int_to_ptr.vmem [resolvable:$true] %s37
      %43 = dma.hbm_to_vmem [thread:$0]  %s36, 512, %s38, [#allocation5], 128, 128, 8
    $region9: #{tpu_custom_call.1} parent=1 // pred_fallthru
      _
    // Predicated region
    $region10: #{tpu_custom_call.1} parent=1 // pred_check
      _
    $region11: #{tpu_custom_call.1} parent=1 // pred_check_branch
      %45 = sbr.rel (0) target = $region13
    $region12: #{tpu_custom_call.1} parent=1 // pred_region
      _
    $region13: #{tpu_custom_call.1} parent=1 // pred_fallthru
      _
    // Predicated region
    $region14: #{tpu_custom_call.1} parent=1 // pred_check
      _
    $region15: #{tpu_custom_call.1} parent=1 // pred_check_branch
      %47 = sbr.rel (0) target = $region17
    $region16: #{tpu_custom_call.1} parent=1 // pred_region
      %49 = vsyncadd [#allocation8], 0
      %s50 = sshll.u32 %s3, 4
      %s51 = int_to_ptr.hbm [resolvable:$true] %s50
      %s52 = sshll.u32 [#allocation7], 4
      %s53 = int_to_ptr.vmem [resolvable:$true] %s52
      %58 = dma.hbm_to_vmem [thread:$0]  %s51, 256, %s53, [#allocation8], 64, 64, 4
    $region17: #{tpu_custom_call.1} parent=1 // pred_fallthru
      _
    // Predicated region
    $region18: #{tpu_custom_call.1} parent=1 // pred_check
      _
    $region19: #{tpu_custom_call.1} parent=1 // pred_check_branch
      %60 = sbr.rel (0) target = $region21
    $region20: #{tpu_custom_call.1} parent=1 // pred_region
      %62 = vsyncadd [#allocation8], 0
      %s63 = sshll.u32 %s4, 4
      %s64 = int_to_ptr.hbm [resolvable:$true] %s63
      %s65 = sshll.u32 [#allocation9], 4
      %s66 = int_to_ptr.vmem [resolvable:$true] %s65
      %71 = dma.hbm_to_vmem [thread:$0]  %s64, 256, %s66, [#allocation8], 64, 64, 4
    $region21: #{tpu_custom_call.1} parent=1 // pred_fallthru
      _
    // Predicated region
    $region22: #{tpu_custom_call.1} parent=1 // pred_check
      _
    $region23: #{tpu_custom_call.1} parent=1 // pred_check_branch
      %73 = sbr.rel (0) target = $region25
    $region24: #{tpu_custom_call.1} parent=1 // pred_region
      _
    $region25: #{tpu_custom_call.1} parent=1 // pred_fallthru
      _
    // Predicated region
    $region26: #{tpu_custom_call.1} parent=1 // pred_check
      _
    $region27: #{tpu_custom_call.1} parent=1 // pred_check_branch
      %75 = sbr.rel (0) target = $region29
    $region28: #{tpu_custom_call.1} parent=1 // pred_region
      %77 = vsyncadd [#allocation11], 0
      %s78 = sshll.u32 %s7, 4
      %s79 = int_to_ptr.hbm [resolvable:$true] %s78
      %s80 = sshll.u32 [#allocation10], 4
      %s81 = int_to_ptr.vmem [resolvable:$true] %s80
      %86 = dma.hbm_to_vmem [thread:$0]  %s79, 192, %s81, [#allocation11], 64, 64, 4
    $region29: #{tpu_custom_call.1} parent=1 // pred_fallthru
      _
    // Predicated region
    $region30: #{tpu_custom_call.1} parent=1 // pred_check
      _
    $region31: #{tpu_custom_call.1} parent=1 // pred_check_branch
      %88 = sbr.rel (0) target = $region33
    $region32: #{tpu_custom_call.1} parent=1 // pred_region
      _
    $region33: #{tpu_custom_call.1} parent=1 // pred_fallthru
      _
    // Predicated region
    $region34: #{tpu_custom_call.1} parent=1 // pred_check
      _
    $region35: #{tpu_custom_call.1} parent=1 // pred_check_branch
      %90 = sbr.rel (0) target = $region37
    $region36: #{tpu_custom_call.1} parent=1 // pred_region
      _
    $region37: #{tpu_custom_call.1} parent=1 // pred_fallthru
      _
    // Predicated region
    $region38: #{tpu_custom_call.1} parent=1 // pred_check
      _
    $region39: #{tpu_custom_call.1} parent=1 // pred_check_branch
      %92 = sbr.rel (0) target = $region41
    $region40: #{tpu_custom_call.1} parent=1 // pred_region
      %94 = vsyncadd [#allocation11], 0
      %s95 = sshll.u32 %s10, 4
      %s96 = int_to_ptr.hbm [resolvable:$true] %s95
      %s97 = sshll.u32 [#allocation12], 4
      %s98 = int_to_ptr.vmem [resolvable:$true] %s97
      %103 = dma.hbm_to_vmem [thread:$0]  %s96, 512, %s98, [#allocation11], 128, 128, 8
    $region41: #{tpu_custom_call.1} parent=1 // pred_fallthru
      _
    // Predicated region
    $region42: #{tpu_custom_call.1} parent=1 // pred_check
      _
    $region43: #{tpu_custom_call.1} parent=1 // pred_check_branch
      %105 = sbr.rel (0) target = $region45
    $region44: #{tpu_custom_call.1} parent=1 // pred_region
      %107 = vsyncadd [#allocation14], 0
      %s108 = sshll.u32 %s11, 4
      %s109 = int_to_ptr.hbm [resolvable:$true] %s108
      %s110 = sshll.u32 [#allocation13], 4
      %s111 = int_to_ptr.vmem [resolvable:$true] %s110
      %116 = dma.hbm_to_vmem [thread:$0]  %s109, 512, %s111, [#allocation14], 128, 128, 8
    $region45: #{tpu_custom_call.1} parent=1 // pred_fallthru
      _
    // Predicated region
    $region46: #{tpu_custom_call.1} parent=1 // pred_check
      _
    $region47: #{tpu_custom_call.1} parent=1 // pred_check_branch
      %118 = sbr.rel (0) target = $region49
    $region48: #{tpu_custom_call.1} parent=1 // pred_region
      _
    $region49: #{tpu_custom_call.1} parent=1 // pred_fallthru
      _
    // Predicated region
    $region50: #{tpu_custom_call.1} parent=1 // pred_check
      _
    $region51: #{tpu_custom_call.1} parent=1 // pred_check_branch
      %120 = sbr.rel (0) target = $region53
    $region52: #{tpu_custom_call.1} parent=1 // pred_region
      %122 = vsyncadd [#allocation14], 0
      %s123 = sshll.u32 %s13, 4
      %s124 = int_to_ptr.hbm [resolvable:$true] %s123
      %s125 = sshll.u32 [#allocation15], 4
      %s126 = int_to_ptr.vmem [resolvable:$true] %s125
      %131 = dma.hbm_to_vmem [thread:$0]  %s124, 512, %s126, [#allocation14], 128, 128, 8
    $region53: #{tpu_custom_call.1} parent=1 // pred_fallthru
      _
    // Predicated region
    $region54: #{tpu_custom_call.1} parent=1 // pred_check
      _
    $region55: #{tpu_custom_call.1} parent=1 // pred_check_branch
      %133 = sbr.rel (0) target = $region57
    $region56: #{tpu_custom_call.1} parent=1 // pred_region
      %135 = vsyncadd [#allocation17], 0
      %s136 = sshll.u32 %s14, 4
      %s137 = int_to_ptr.hbm [resolvable:$true] %s136
      %s138 = sshll.u32 [#allocation16], 4
      %s139 = int_to_ptr.vmem [resolvable:$true] %s138
      %144 = dma.hbm_to_vmem [thread:$0]  %s137, 512, %s139, [#allocation17], 128, 128, 8
    $region57: #{tpu_custom_call.1} parent=1 // pred_fallthru
      _
    // Predicated region
    $region58: #{tpu_custom_call.1} parent=1 // pred_check
      _
    $region59: #{tpu_custom_call.1} parent=1 // pred_check_branch
      %146 = sbr.rel (0) target = $region61
    $region60: #{tpu_custom_call.1} parent=1 // pred_region
      _
    $region61: #{tpu_custom_call.1} parent=1 // pred_fallthru
      _
    // Predicated region
    $region62: #{tpu_custom_call.1} parent=1 // pred_check
      _
    $region63: #{tpu_custom_call.1} parent=1 // pred_check_branch
      %148 = sbr.rel (0) target = $region65
    $region64: #{tpu_custom_call.1} parent=1 // pred_region
      %150 = vsyncadd [#allocation17], 0
      %s151 = sshll.u32 %s16, 4
      %s152 = int_to_ptr.hbm [resolvable:$true] %s151
      %s153 = sshll.u32 [#allocation18], 4
      %s154 = int_to_ptr.vmem [resolvable:$true] %s153
      %159 = dma.hbm_to_vmem [thread:$0]  %s152, 512, %s154, [#allocation17], 128, 128, 8
    $region65: #{tpu_custom_call.1} parent=1 // pred_fallthru
      _
    // Predicated region
    $region66: #{tpu_custom_call.1} parent=1 // pred_check
      _
    $region67: #{tpu_custom_call.1} parent=1 // pred_check_branch
      %161 = sbr.rel (0) target = $region69
    $region68: #{tpu_custom_call.1} parent=1 // pred_region
      _
    $region69: #{tpu_custom_call.1} parent=1 // pred_fallthru
      _
    // Predicated region
    $region70: #{tpu_custom_call.1} parent=1 // pred_check
      _
    $region71: #{tpu_custom_call.1} parent=1 // pred_check_branch
      %163 = sbr.rel (0) target = $region73
    $region72: #{tpu_custom_call.1} parent=1 // pred_region
      %165 = dma.done [#allocation5], 512
    $region73: #{tpu_custom_call.1} parent=1 // pred_fallthru
      _
    // Predicated region
    $region74: #{tpu_custom_call.1} parent=1 // pred_check
      _
    $region75: #{tpu_custom_call.1} parent=1 // pred_check_branch
      %167 = sbr.rel (0) target = $region77
    $region76: #{tpu_custom_call.1} parent=1 // pred_region
      %169 = dma.done [#allocation8], 256
    $region77: #{tpu_custom_call.1} parent=1 // pred_fallthru
      _
    // Predicated region
    $region78: #{tpu_custom_call.1} parent=1 // pred_check
      _
    $region79: #{tpu_custom_call.1} parent=1 // pred_check_branch
      %171 = sbr.rel (0) target = $region81
    $region80: #{tpu_custom_call.1} parent=1 // pred_region
      %173 = dma.done [#allocation8], 256
    $region81: #{tpu_custom_call.1} parent=1 // pred_fallthru
      _
    // Predicated region
    $region82: #{tpu_custom_call.1} parent=1 // pred_check
      _
    $region83: #{tpu_custom_call.1} parent=1 // pred_check_branch
      %175 = sbr.rel (0) target = $region85
    $region84: #{tpu_custom_call.1} parent=1 // pred_region
      %177 = dma.done [#allocation11], 192
    $region85: #{tpu_custom_call.1} parent=1 // pred_fallthru
      _
    // Predicated region
    $region86: #{tpu_custom_call.1} parent=1 // pred_check
      _
    $region87: #{tpu_custom_call.1} parent=1 // pred_check_branch
      %179 = sbr.rel (0) target = $region89
    $region88: #{tpu_custom_call.1} parent=1 // pred_region
      %181 = dma.done [#allocation11], 512
    $region89: #{tpu_custom_call.1} parent=1 // pred_fallthru
      _
    // Predicated region
    $region90: #{tpu_custom_call.1} parent=1 // pred_check
      _
    $region91: #{tpu_custom_call.1} parent=1 // pred_check_branch
      %183 = sbr.rel (0) target = $region93
    $region92: #{tpu_custom_call.1} parent=1 // pred_region
      %185 = dma.done [#allocation14], 512
    $region93: #{tpu_custom_call.1} parent=1 // pred_fallthru
      _
    // Predicated region
    $region94: #{tpu_custom_call.1} parent=1 // pred_check
      _
    $region95: #{tpu_custom_call.1} parent=1 // pred_check_branch
      %187 = sbr.rel (0) target = $region97
    $region96: #{tpu_custom_call.1} parent=1 // pred_region
      %189 = dma.done [#allocation14], 512
    $region97: #{tpu_custom_call.1} parent=1 // pred_fallthru
      _
    // Predicated region
    $region98: #{tpu_custom_call.1} parent=1 // pred_check
      _
    $region99: #{tpu_custom_call.1} parent=1 // pred_check_branch
      %191 = sbr.rel (0) target = $region101
    $region100: #{tpu_custom_call.1} parent=1 // pred_region
      %193 = dma.done [#allocation17], 512
    $region101: #{tpu_custom_call.1} parent=1 // pred_fallthru
      _
    // Predicated region
    $region102: #{tpu_custom_call.1} parent=1 // pred_check
      _
    $region103: #{tpu_custom_call.1} parent=1 // pred_check_branch
      %195 = sbr.rel (0) target = $region105
    $region104: #{tpu_custom_call.1} parent=1 // pred_region
      %197 = dma.done [#allocation17], 512
    $region105: #{tpu_custom_call.1} parent=1 // pred_fallthru
      _
    // Predicated region
    $region106: #{tpu_custom_call.1} parent=1 // pred_check
      _
    $region107: #{tpu_custom_call.1} parent=1 // pred_check_branch
      %200 = sbr.rel target = $region109
    $region108: #{tpu_custom_call.1} parent=1 // pred_region
      %201 = sst [smem:[#allocation22]] [#allocation21]
      %202 = sst [smem:[#allocation23]] [#allocation20]
    $region109: #{tpu_custom_call.1} parent=1 // pred_fallthru
      _
    %204 = shalt.err (0)
    %s206 = sshll.u32 %s5, 4
    %s207 = int_to_ptr.hbm [resolvable:$true] %s206
    %s208 = sshll.u32 [#allocation2], 4
    %s209 = int_to_ptr.vmem [resolvable:$true] %s208
    %211 = dma.hbm_to_vmem [thread:$0]  %s207, 128, %s209, [#allocation3]
    %v212 = vld [vmem:[%s0] sm:$0xf]
    %v213 = vld [vmem:[%s0 + $0x4] sm:$0xf]
    %v214 = vunpack.c.l.bf16 %v212
    %v215 = vunpack.c.l.bf16 %v213
    %v216 = vld [vmem:[#allocation4] sm:$0xff]
    %v217 = vld [vmem:[#allocation4 + $0x8] sm:$0xff]
    %v218 = vld [vmem:[#allocation4 + $0x10] sm:$0xff]
    %v219 = vld [vmem:[#allocation4 + $0x18] sm:$0xff]
    %v220 = vld [vmem:[%s2] sm:$0x1]
    %v222 = vperm.slane %v220, 0
    %vm224 = vcmask 261120
    %v226 = vsel %vm224, %v214, 0
    %v229 = vsel %vm224, %v215, 0
    %231 = vmatpush.msra.mxu0 0.0
    %232 = vmatpush.msra.mxu0 0.0
    %233 = vmatpush.msra.mxu0 0.0
    %234 = vmatpush.msra.mxu0 0.0
    %235 = vmatpush.msra.mxu0 0.0
    %236 = vmatpush.msra.mxu0 0.0
    %237 = vmatpush.msra.mxu0 0.0
    %238 = vmatpush.msra.mxu0 0.0
    %239 = vmatpush.msra.mxu0 0.0
    %240 = vmatpush.msra.mxu0 0.0
    %241 = vmatpush.msra.mxu0 0.0
    %242 = vmatpush.msra.mxu0 0.0
    %243 = vmatpush.msra.mxu0 %v219
    %244 = vmatpush.msra.mxu0 %v218
    %245 = vmatpush.msra.mxu0 %v217
    %246 = vmatpush.msra.mxu0 %v216
    %247 = vmatmul.f32.gmra.mxu0 %v226
    %v248 = vpop.f32.mrf.mxu0
    %v249 = vadd.f32 %v222, %v248
    %250 = vmatmul.f32.gmra.mxu0 %v229
    %v251 = vpop.f32.mrf.mxu0
    %v252 = vadd.f32 %v222, %v251
    %253 = vdwg.mxu0
    %v254 = vxor.u32 %v249, 2147483648
    %v255 = vxor.u32 %v252, 2147483648
    %v256 = vmul.f32 %v254, 1.442695
    %v257 = vpow.pop %v256
    %v258 = vmul.f32 %v255, 1.442695
    %v259 = vpow.pop %v258
    %v260 = vadd.f32 %v257, 1.0
    %v261 = vadd.f32 %v259, 1.0
    %v262 = vrcp.pop %v260
    %v263 = vmul.f32 %v260, %v262
    %v264 = vsub.f32 1.0, %v263
    %v265 = vmul.f32 %v262, %v264
    %v266 = vadd.f32 %v262, %v265
    %vm267 = vweird.f32 %v260
    %vm268 = vweird.f32 %v262
    %vm269 = vmor %vm267, %vm268
    %v270 = vsel %vm269, %v262, %v266
    %v271 = vand.u32 2147483647, %v260
    %vm272 = vcmp.eq.f32.partialorder %v271, 8.507059e+37
    %v273 = vand.u32 %v260, 2147483648
    %v274 = vor.u32 1.1754944e-38, %v273
    %v275 = vsel %vm272, %v274, %v270
    %v276 = vmul.f32 1.0, %v275
    %v277 = vrcp.pop %v261
    %v278 = vmul.f32 %v261, %v277
    %v279 = vsub.f32 1.0, %v278
    %v280 = vmul.f32 %v277, %v279
    %v281 = vadd.f32 %v277, %v280
    %vm282 = vweird.f32 %v261
    %vm283 = vweird.f32 %v277
    %vm284 = vmor %vm282, %vm283
    %v285 = vsel %vm284, %v277, %v281
    %v286 = vand.u32 2147483647, %v261
    %vm287 = vcmp.eq.f32.partialorder %v286, 8.507059e+37
    %v288 = vand.u32 %v261, 2147483648
    %v289 = vor.u32 1.1754944e-38, %v288
    %v290 = vsel %vm287, %v289, %v285
    %v291 = vmul.f32 1.0, %v290
    %v292 = vpack.c.bf16 %v291, %v276
    %v293 = vld [vmem:[#allocation7] sm:$0xf]
    %v294 = vld [vmem:[#allocation7 + $0x4] sm:$0xf]
    %v295 = vld [vmem:[#allocation7 + $0x8] sm:$0xf]
    %v296 = vld [vmem:[#allocation7 + $0xc] sm:$0xf]
    %v297 = vld [vmem:[#allocation9] sm:$0xf]
    %v298 = vld [vmem:[#allocation9 + $0x4] sm:$0xf]
    %v299 = vld [vmem:[#allocation9 + $0x8] sm:$0xf]
    %v300 = vld [vmem:[#allocation9 + $0xc] sm:$0xf]
    %v301 = vld [vmem:[%s6] sm:$0xf]
    %v302 = vld [vmem:[%s6 + $0x4] sm:$0xf]
    %v307 = vunpack.c.l.b16 %v293
    %v308 = vunpack.c.l.b16 %v294
    %v309 = vunpack.c.l.b16 %v295
    %v310 = vunpack.c.l.b16 %v296
    %v311 = vpack.c.b16 %v308, %v307
    %v312 = vpack.c.b16 %v310, %v309
    %v314 = vsel %vm224, %v311, 0
    %v317 = vsel %vm224, %v312, 0
    %v320 = vsel %vm224, %v292, 0
    %322 = vmatpush.bf16.xpose.msra.mxu0 0
    %323 = vmatpush.bf16.xpose.msra.mxu0 0
    %324 = vmatpush.bf16.xpose.msra.mxu0 0
    %325 = vmatpush.bf16.xpose.msra.mxu0 0
    %326 = vmatpush.bf16.xpose.msra.mxu0 0
    %327 = vmatpush.bf16.xpose.msra.mxu0 0
    %328 = vmatpush.bf16.xpose.msra.mxu0 0
    %329 = vmatpush.bf16.xpose.msra.mxu0 %v320
    %330 = vmatmul.bf16.gmra.mxu0 %v314
    %v331 = vpop.f32.mrf.mxu0
    %v332 = vadd.f32 0.0, %v331
    %v333 = vpop.f32.mrf.mxu0
    %v334 = vadd.f32 0.0, %v333
    %335 = vmatmul.bf16.gmra.mxu0 %v317
    %v336 = vpop.f32.mrf.mxu0
    %v337 = vadd.f32 0.0, %v336
    %v338 = vpop.f32.mrf.mxu0
    %v339 = vadd.f32 0.0, %v338
    %340 = vdwg.mxu0
    %v341 = vmul.f32 %v332, %v332
    %v342 = vmul.f32 %v334, %v334
    %v343 = vmul.f32 %v337, %v337
    %v344 = vmul.f32 %v339, %v339
    %vm345 = vcmask 130048
    %v346 = vsel %vm345, %v341, 0.0
    %v347 = vrot.slane %v346, 4
    %v348 = vadd.f32 %v346, %v347
    %v349 = vrot.slane %v348, 2
    %v350 = vadd.f32 %v348, %v349
    %v351 = vrot.slane %v350, 1
    %v352 = vadd.f32 %v350, %v351
    %v353 = vsel %vm345, %v342, 0.0
    %v354 = vrot.slane %v353, 4
    %v355 = vadd.f32 %v353, %v354
    %v356 = vrot.slane %v355, 2
    %v357 = vadd.f32 %v355, %v356
    %v358 = vrot.slane %v357, 1
    %v359 = vadd.f32 %v357, %v358
    %v360 = vsel %vm345, %v343, 0.0
    %v361 = vrot.slane %v360, 4
    %v362 = vadd.f32 %v360, %v361
    %v363 = vrot.slane %v362, 2
    %v364 = vadd.f32 %v362, %v363
    %v365 = vrot.slane %v364, 1
    %v366 = vadd.f32 %v364, %v365
    %v367 = vsel %vm345, %v344, 0.0
    %v368 = vrot.slane %v367, 4
    %v369 = vadd.f32 %v367, %v368
    %v370 = vrot.slane %v369, 2
    %v371 = vadd.f32 %v369, %v370
    %v372 = vrot.slane %v371, 1
    %v373 = vadd.f32 %v371, %v372
    %v374 = vpack.c.bf16 %v352, %v352
    %v375 = vpack.c.bf16 %v359, %v359
    %v376 = vpack.c.bf16 %v366, %v366
    %v377 = vpack.c.bf16 %v373, %v373
    %v382 = vunpack.c.l.b16 %v374
    %v383 = vunpack.c.l.b16 %v375
    %v384 = vunpack.c.l.b16 %v376
    %v385 = vunpack.c.l.b16 %v377
    %vm386 = vcmask 1041409
    %v387 = vsel %vm386, %v383, %v382
    %vm388 = vcmask 1042434
    %v389 = vsel %vm388, %v384, %v387
    %vm390 = vcmask 1043459
    %v391 = vsel %vm390, %v385, %v389
    %v392 = vpack.c.b16 %v391, %v391
    %v395 = vunpack.c.l.b16 %v301
    %v396 = vunpack.c.l.b16 %v302
    %v397 = vpack.c.b16 %v396, %v395
    %v400 = vsel %vm345, %v392, 0
    %402 = vmatpush.bf16.msra.mxu0 0
    %403 = vmatpush.bf16.msra.mxu0 0
    %404 = vmatpush.bf16.msra.mxu0 0
    %405 = vmatpush.bf16.msra.mxu0 0
    %406 = vmatpush.bf16.msra.mxu0 0
    %407 = vmatpush.bf16.msra.mxu0 0
    %408 = vmatpush.bf16.msra.mxu0 0
    %409 = vmatpush.bf16.msra.mxu0 %v397
    %410 = vmatmul.bf16.gmra.mxu0 %v400
    %v411 = vpop.f32.mrf.mxu0
    %v412 = vadd.f32 0.0, %v411
    %v413 = vpop.f32.mrf.mxu0
    %414 = vdwg.mxu0
    %v415 = vld [vmem:[#allocation10] sm:$0xf]
    %s416 = smul.u32 4, 2
    %s417 = smul.u32 %s416, 1
    %s418 = sshll.u32 %s417, 4
    %419 = dma.done [#allocation3], %s418
    %v420 = vld [vmem:[#allocation2] sm:$0xf]
    %v421 = vld [vmem:[#allocation2 + $0x4] sm:$0xf]
    %v424 = vunpack.c.l.b16 %v420
    %v425 = vunpack.c.l.b16 %v421
    %v426 = vpack.c.b16 %v425, %v424
    %v428 = vsel %vm345, %v426, 0
    %430 = vmatpush.bf16.msra.mxu0 0
    %431 = vmatpush.bf16.msra.mxu0 0
    %432 = vmatpush.bf16.msra.mxu0 0
    %433 = vmatpush.bf16.msra.mxu0 0
    %434 = vmatpush.bf16.msra.mxu0 0
    %435 = vmatpush.bf16.msra.mxu0 0
    %436 = vmatpush.bf16.msra.mxu0 0
    %437 = vmatpush.bf16.msra.mxu0 %v292
    %438 = vmatmul.bf16.gmra.mxu0 %v428
    %v439 = vpop.f32.mrf.mxu0
    %v440 = vadd.f32 0.0, %v439
    %v441 = vpop.f32.mrf.mxu0
    %v442 = vadd.f32 0.0, %v441
    %443 = vdwg.mxu0
    %v444 = vpack.c.bf16 %v442, %v440
    %v449 = vunpack.c.l.b16 %v297
    %v450 = vunpack.c.l.b16 %v298
    %v451 = vunpack.c.l.b16 %v299
    %v452 = vunpack.c.l.b16 %v300
    %v453 = vpack.c.b16 %v450, %v449
    %v454 = vpack.c.b16 %v452, %v451
    %v458 = vsel %vm224, %v453, 0
    %v461 = vsel %vm224, %v454, 0
    %463 = vmatpush.bf16.msra.mxu0 0
    %464 = vmatpush.bf16.msra.mxu0 0
    %465 = vmatpush.bf16.msra.mxu0 0
    %466 = vmatpush.bf16.msra.mxu0 0
    %467 = vmatpush.bf16.msra.mxu0 0
    %468 = vmatpush.bf16.msra.mxu0 0
    %469 = vmatpush.bf16.msra.mxu0 %v312
    %470 = vmatpush.bf16.msra.mxu0 %v311
    %471 = vmatmul.bf16.gmra.mxu0 %v458
    %v472 = vpop.f32.mrf.mxu0
    %v473 = vadd.f32 0.0, %v472
    %v474 = vpop.f32.mrf.mxu0
    %v475 = vadd.f32 0.0, %v474
    %476 = vmatmul.bf16.gmra.mxu0 %v461
    %v477 = vpop.f32.mrf.mxu0
    %v478 = vadd.f32 0.0, %v477
    %v479 = vpop.f32.mrf.mxu0
    %v480 = vadd.f32 0.0, %v479
    %481 = vdwg.mxu0
    %v482 = vpack.c.bf16 %v475, %v473
    %v483 = vpack.c.bf16 %v480, %v478
    %v485 = vsel %vm224, %v482, 0
    %v488 = vsel %vm224, %v483, 0
    %v491 = vsel %vm224, %v444, 0
    %493 = vmatpush.bf16.xpose.msra.mxu0 0
    %494 = vmatpush.bf16.xpose.msra.mxu0 0
    %495 = vmatpush.bf16.xpose.msra.mxu0 0
    %496 = vmatpush.bf16.xpose.msra.mxu0 0
    %497 = vmatpush.bf16.xpose.msra.mxu0 0
    %498 = vmatpush.bf16.xpose.msra.mxu0 0
    %499 = vmatpush.bf16.xpose.msra.mxu0 0
    %500 = vmatpush.bf16.xpose.msra.mxu0 %v491
    %501 = vmatmul.bf16.gmra.mxu0 %v485
    %v502 = vpop.f32.mrf.mxu0
    %v503 = vadd.f32 0.0, %v502
    %v504 = vpop.f32.mrf.mxu0
    %v505 = vadd.f32 0.0, %v504
    %506 = vmatmul.bf16.gmra.mxu0 %v488
    %v507 = vpop.f32.mrf.mxu0
    %v508 = vadd.f32 0.0, %v507
    %v509 = vpop.f32.mrf.mxu0
    %v510 = vadd.f32 0.0, %v509
    %511 = vdwg.mxu0
    %v512 = vmul.f32 %v332, %v503
    %v513 = vmul.f32 %v334, %v505
    %v514 = vmul.f32 %v337, %v508
    %v515 = vmul.f32 %v339, %v510
    %v516 = vsel %vm345, %v512, 0.0
    %v517 = vrot.slane %v516, 4
    %v518 = vadd.f32 %v516, %v517
    %v519 = vrot.slane %v518, 2
    %v520 = vadd.f32 %v518, %v519
    %v521 = vrot.slane %v520, 1
    %v522 = vadd.f32 %v520, %v521
    %v523 = vsel %vm345, %v513, 0.0
    %v524 = vrot.slane %v523, 4
    %v525 = vadd.f32 %v523, %v524
    %v526 = vrot.slane %v525, 2
    %v527 = vadd.f32 %v525, %v526
    %v528 = vrot.slane %v527, 1
    %v529 = vadd.f32 %v527, %v528
    %v530 = vsel %vm345, %v514, 0.0
    %v531 = vrot.slane %v530, 4
    %v532 = vadd.f32 %v530, %v531
    %v533 = vrot.slane %v532, 2
    %v534 = vadd.f32 %v532, %v533
    %v535 = vrot.slane %v534, 1
    %v536 = vadd.f32 %v534, %v535
    %v537 = vsel %vm345, %v515, 0.0
    %v538 = vrot.slane %v537, 4
    %v539 = vadd.f32 %v537, %v538
    %v540 = vrot.slane %v539, 2
    %v541 = vadd.f32 %v539, %v540
    %v542 = vrot.slane %v541, 1
    %v543 = vadd.f32 %v541, %v542
    %v544 = vpack.c.bf16 %v522, %v522
    %v545 = vpack.c.bf16 %v529, %v529
    %v546 = vpack.c.bf16 %v536, %v536
    %v547 = vpack.c.bf16 %v543, %v543
    %v552 = vunpack.c.l.b16 %v544
    %v553 = vunpack.c.l.b16 %v545
    %v554 = vunpack.c.l.b16 %v546
    %v555 = vunpack.c.l.b16 %v547
    %v556 = vsel %vm386, %v553, %v552
    %v557 = vsel %vm388, %v554, %v556
    %v558 = vsel %vm390, %v555, %v557
    %v559 = vpack.c.b16 %v558, %v558
    %v561 = vsel %vm345, %v559, 0
    %563 = vmatpush.bf16.msra.mxu0 0
    %564 = vmatpush.bf16.msra.mxu0 0
    %565 = vmatpush.bf16.msra.mxu0 0
    %566 = vmatpush.bf16.msra.mxu0 0
    %567 = vmatpush.bf16.msra.mxu0 0
    %568 = vmatpush.bf16.msra.mxu0 0
    %569 = vmatpush.bf16.msra.mxu0 0
    %570 = vmatpush.bf16.msra.mxu0 %v397
    %571 = vmatmul.bf16.gmra.mxu0 %v561
    %v572 = vpop.f32.mrf.mxu0
    %v573 = vadd.f32 0.0, %v572
    %v574 = vpop.f32.mrf.mxu0
    %575 = vdwg.mxu0
    %s576 = scalar_lea.vmem [#allocation10], 4
    %v577 = vld [vmem:[%s576] sm:$0xf]
    %578 = vxpose.xlu0.b32.start [1/16] %v573, 128
    %579 = vxpose.xlu0.b32.cont [2/16] 0.0, 128
    %580 = vxpose.xlu0.b32.cont [3/16] 0.0, 128
    %581 = vxpose.xlu0.b32.cont [4/16] 0.0, 128
    %582 = vxpose.xlu0.b32.cont [5/16] 0.0, 128
    %583 = vxpose.xlu0.b32.cont [6/16] 0.0, 128
    %584 = vxpose.xlu0.b32.cont [7/16] 0.0, 128
    %585 = vxpose.xlu0.b32.cont [8/16] 0.0, 128
    %586 = vxpose.xlu0.b32.cont [9/16] 0.0, 128
    %587 = vxpose.xlu0.b32.cont [10/16] 0.0, 128
    %588 = vxpose.xlu0.b32.cont [11/16] 0.0, 128
    %589 = vxpose.xlu0.b32.cont [12/16] 0.0, 128
    %590 = vxpose.xlu0.b32.cont [13/16] 0.0, 128
    %591 = vxpose.xlu0.b32.cont [14/16] 0.0, 128
    %592 = vxpose.xlu0.b32.cont [15/16] 0.0, 128
    %593 = vxpose.xlu0.b32.end [16/16] 0.0, 128
    %v594 = vpop.trf.xlu0
    %v595 = vpop.trf.xlu0
    %v596 = vpop.trf.xlu0
    %v597 = vpop.trf.xlu0
    %v598 = vpop.trf.xlu0
    %v599 = vpop.trf.xlu0
    %v600 = vpop.trf.xlu0
    %v601 = vpop.trf.xlu0
    %v602 = vpop.trf.xlu0
    %v603 = vpop.trf.xlu0
    %v604 = vpop.trf.xlu0
    %v605 = vpop.trf.xlu0
    %v606 = vpop.trf.xlu0
    %v607 = vpop.trf.xlu0
    %v608 = vpop.trf.xlu0
    %v609 = vpop.trf.xlu0
    %vm610 = vcmask 31744
    %v612 = vsel %vm610, %v594, 0
    %vm614 = vcmask 1043456
    %v616 = vsel %vm614, %v577, 0
    %618 = vmatpush.msra.mxu0 0.0
    %619 = vmatpush.msra.mxu0 0.0
    %620 = vmatpush.msra.mxu0 0.0
    %621 = vmatpush.msra.mxu0 0.0
    %622 = vmatpush.msra.mxu0 0.0
    %623 = vmatpush.msra.mxu0 0.0
    %624 = vmatpush.msra.mxu0 0.0
    %625 = vmatpush.msra.mxu0 0.0
    %626 = vmatpush.msra.mxu0 0.0
    %627 = vmatpush.msra.mxu0 0.0
    %628 = vmatpush.msra.mxu0 0.0
    %629 = vmatpush.msra.mxu0 0.0
    %630 = vmatpush.msra.mxu0 0.0
    %631 = vmatpush.msra.mxu0 0.0
    %632 = vmatpush.msra.mxu0 0.0
    %633 = vmatpush.msra.mxu0 %v616
    %634 = vmatmul.f32.gmra.mxu0 %v612
    %v635 = vpop.f32.mrf.mxu0
    %v636 = vadd.f32 0.0, %v635
    %637 = vdwg.mxu0
    %638 = vxpose.xlu0.b32.start [1/16] %v412, 128
    %639 = vxpose.xlu0.b32.cont [2/16] 0.0, 128
    %640 = vxpose.xlu0.b32.cont [3/16] 0.0, 128
    %641 = vxpose.xlu0.b32.cont [4/16] 0.0, 128
    %642 = vxpose.xlu0.b32.cont [5/16] 0.0, 128
    %643 = vxpose.xlu0.b32.cont [6/16] 0.0, 128
    %644 = vxpose.xlu0.b32.cont [7/16] 0.0, 128
    %645 = vxpose.xlu0.b32.cont [8/16] 0.0, 128
    %646 = vxpose.xlu0.b32.cont [9/16] 0.0, 128
    %647 = vxpose.xlu0.b32.cont [10/16] 0.0, 128
    %648 = vxpose.xlu0.b32.cont [11/16] 0.0, 128
    %649 = vxpose.xlu0.b32.cont [12/16] 0.0, 128
    %650 = vxpose.xlu0.b32.cont [13/16] 0.0, 128
    %651 = vxpose.xlu0.b32.cont [14/16] 0.0, 128
    %652 = vxpose.xlu0.b32.cont [15/16] 0.0, 128
    %653 = vxpose.xlu0.b32.end [16/16] 0.0, 128
    %v654 = vpop.trf.xlu0
    %v655 = vpop.trf.xlu0
    %v656 = vpop.trf.xlu0
    %v657 = vpop.trf.xlu0
    %v658 = vpop.trf.xlu0
    %v659 = vpop.trf.xlu0
    %v660 = vpop.trf.xlu0
    %v661 = vpop.trf.xlu0
    %v662 = vpop.trf.xlu0
    %v663 = vpop.trf.xlu0
    %v664 = vpop.trf.xlu0
    %v665 = vpop.trf.xlu0
    %v666 = vpop.trf.xlu0
    %v667 = vpop.trf.xlu0
    %v668 = vpop.trf.xlu0
    %v669 = vpop.trf.xlu0
    %v671 = vsel %vm610, %v654, 0
    %v674 = vsel %vm614, %v415, 0
    %676 = vmatpush.msra.mxu0 0.0
    %677 = vmatpush.msra.mxu0 0.0
    %678 = vmatpush.msra.mxu0 0.0
    %679 = vmatpush.msra.mxu0 0.0
    %680 = vmatpush.msra.mxu0 0.0
    %681 = vmatpush.msra.mxu0 0.0
    %682 = vmatpush.msra.mxu0 0.0
    %683 = vmatpush.msra.mxu0 0.0
    %684 = vmatpush.msra.mxu0 0.0
    %685 = vmatpush.msra.mxu0 0.0
    %686 = vmatpush.msra.mxu0 0.0
    %687 = vmatpush.msra.mxu0 0.0
    %688 = vmatpush.msra.mxu0 0.0
    %689 = vmatpush.msra.mxu0 0.0
    %690 = vmatpush.msra.mxu0 0.0
    %691 = vmatpush.msra.mxu0 %v674
    %692 = vmatmul.f32.gmra.mxu0 %v671
    %v693 = vpop.f32.mrf.mxu0
    %v694 = vadd.f32 %v636, %v693
    %695 = vdwg.mxu0
    %696 = vmatpush.bf16.msra.mxu0 0
    %697 = vmatpush.bf16.msra.mxu0 0
    %698 = vmatpush.bf16.msra.mxu0 0
    %699 = vmatpush.bf16.msra.mxu0 0
    %700 = vmatpush.bf16.msra.mxu0 0
    %701 = vmatpush.bf16.msra.mxu0 0
    %702 = vmatpush.bf16.msra.mxu0 0
    %703 = vmatpush.bf16.msra.mxu0 %v444
    %704 = vmatmul.bf16.gmra.mxu0 %v428
    %v705 = vpop.f32.mrf.mxu0
    %v706 = vadd.f32 0.0, %v705
    %v707 = vpop.f32.mrf.mxu0
    %v708 = vadd.f32 0.0, %v707
    %709 = vdwg.mxu0
    %v710 = vpack.c.bf16 %v708, %v706
    %711 = vmatpush.bf16.msra.mxu0 0
    %712 = vmatpush.bf16.msra.mxu0 0
    %713 = vmatpush.bf16.msra.mxu0 0
    %714 = vmatpush.bf16.msra.mxu0 0
    %715 = vmatpush.bf16.msra.mxu0 0
    %716 = vmatpush.bf16.msra.mxu0 0
    %717 = vmatpush.bf16.msra.mxu0 %v483
    %718 = vmatpush.bf16.msra.mxu0 %v482
    %719 = vmatmul.bf16.gmra.mxu0 %v458
    %v720 = vpop.f32.mrf.mxu0
    %v721 = vadd.f32 0.0, %v720
    %v722 = vpop.f32.mrf.mxu0
    %v723 = vadd.f32 0.0, %v722
    %724 = vmatmul.bf16.gmra.mxu0 %v461
    %v725 = vpop.f32.mrf.mxu0
    %v726 = vadd.f32 0.0, %v725
    %v727 = vpop.f32.mrf.mxu0
    %v728 = vadd.f32 0.0, %v727
    %729 = vdwg.mxu0
    %v730 = vpack.c.bf16 %v723, %v721
    %v731 = vpack.c.bf16 %v728, %v726
    %v733 = vsel %vm224, %v730, 0
    %v736 = vsel %vm224, %v731, 0
    %v739 = vsel %vm224, %v710, 0
    %741 = vmatpush.bf16.xpose.msra.mxu0 0
    %742 = vmatpush.bf16.xpose.msra.mxu0 0
    %743 = vmatpush.bf16.xpose.msra.mxu0 0
    %744 = vmatpush.bf16.xpose.msra.mxu0 0
    %745 = vmatpush.bf16.xpose.msra.mxu0 0
    %746 = vmatpush.bf16.xpose.msra.mxu0 0
    %747 = vmatpush.bf16.xpose.msra.mxu0 0
    %748 = vmatpush.bf16.xpose.msra.mxu0 %v739
    %749 = vmatmul.bf16.gmra.mxu0 %v733
    %v750 = vpop.f32.mrf.mxu0
    %v751 = vadd.f32 0.0, %v750
    %v752 = vpop.f32.mrf.mxu0
    %v753 = vadd.f32 0.0, %v752
    %754 = vmatmul.bf16.gmra.mxu0 %v736
    %v755 = vpop.f32.mrf.mxu0
    %v756 = vadd.f32 0.0, %v755
    %v757 = vpop.f32.mrf.mxu0
    %v758 = vadd.f32 0.0, %v757
    %759 = vdwg.mxu0
    %v760 = vmul.f32 %v332, %v751
    %v761 = vmul.f32 %v334, %v753
    %v762 = vmul.f32 %v337, %v756
    %v763 = vmul.f32 %v339, %v758
    %v764 = vsel %vm345, %v760, 0.0
    %v765 = vrot.slane %v764, 4
    %v766 = vadd.f32 %v764, %v765
    %v767 = vrot.slane %v766, 2
    %v768 = vadd.f32 %v766, %v767
    %v769 = vrot.slane %v768, 1
    %v770 = vadd.f32 %v768, %v769
    %v771 = vsel %vm345, %v761, 0.0
    %v772 = vrot.slane %v771, 4
    %v773 = vadd.f32 %v771, %v772
    %v774 = vrot.slane %v773, 2
    %v775 = vadd.f32 %v773, %v774
    %v776 = vrot.slane %v775, 1
    %v777 = vadd.f32 %v775, %v776
    %v778 = vsel %vm345, %v762, 0.0
    %v779 = vrot.slane %v778, 4
    %v780 = vadd.f32 %v778, %v779
    %v781 = vrot.slane %v780, 2
    %v782 = vadd.f32 %v780, %v781
    %v783 = vrot.slane %v782, 1
    %v784 = vadd.f32 %v782, %v783
    %v785 = vsel %vm345, %v763, 0.0
    %v786 = vrot.slane %v785, 4
    %v787 = vadd.f32 %v785, %v786
    %v788 = vrot.slane %v787, 2
    %v789 = vadd.f32 %v787, %v788
    %v790 = vrot.slane %v789, 1
    %v791 = vadd.f32 %v789, %v790
    %v792 = vpack.c.bf16 %v770, %v770
    %v793 = vpack.c.bf16 %v777, %v777
    %v794 = vpack.c.bf16 %v784, %v784
    %v795 = vpack.c.bf16 %v791, %v791
    %v800 = vunpack.c.l.b16 %v792
    %v801 = vunpack.c.l.b16 %v793
    %v802 = vunpack.c.l.b16 %v794
    %v803 = vunpack.c.l.b16 %v795
    %v804 = vsel %vm386, %v801, %v800
    %v805 = vsel %vm388, %v802, %v804
    %v806 = vsel %vm390, %v803, %v805
    %v807 = vpack.c.b16 %v806, %v806
    %v809 = vsel %vm345, %v807, 0
    %811 = vmatpush.bf16.msra.mxu0 0
    %812 = vmatpush.bf16.msra.mxu0 0
    %813 = vmatpush.bf16.msra.mxu0 0
    %814 = vmatpush.bf16.msra.mxu0 0
    %815 = vmatpush.bf16.msra.mxu0 0
    %816 = vmatpush.bf16.msra.mxu0 0
    %817 = vmatpush.bf16.msra.mxu0 0
    %818 = vmatpush.bf16.msra.mxu0 %v397
    %819 = vmatmul.bf16.gmra.mxu0 %v809
    %v820 = vpop.f32.mrf.mxu0
    %v821 = vadd.f32 0.0, %v820
    %v822 = vpop.f32.mrf.mxu0
    %823 = vdwg.mxu0
    %s824 = scalar_lea.vmem [#allocation10], 8
    %v825 = vld [vmem:[%s824] sm:$0xf]
    %826 = vxpose.xlu0.b32.start [1/16] %v821, 128
    %827 = vxpose.xlu0.b32.cont [2/16] 0.0, 128
    %828 = vxpose.xlu0.b32.cont [3/16] 0.0, 128
    %829 = vxpose.xlu0.b32.cont [4/16] 0.0, 128
    %830 = vxpose.xlu0.b32.cont [5/16] 0.0, 128
    %831 = vxpose.xlu0.b32.cont [6/16] 0.0, 128
    %832 = vxpose.xlu0.b32.cont [7/16] 0.0, 128
    %833 = vxpose.xlu0.b32.cont [8/16] 0.0, 128
    %834 = vxpose.xlu0.b32.cont [9/16] 0.0, 128
    %835 = vxpose.xlu0.b32.cont [10/16] 0.0, 128
    %836 = vxpose.xlu0.b32.cont [11/16] 0.0, 128
    %837 = vxpose.xlu0.b32.cont [12/16] 0.0, 128
    %838 = vxpose.xlu0.b32.cont [13/16] 0.0, 128
    %839 = vxpose.xlu0.b32.cont [14/16] 0.0, 128
    %840 = vxpose.xlu0.b32.cont [15/16] 0.0, 128
    %841 = vxpose.xlu0.b32.end [16/16] 0.0, 128
    %v842 = vpop.trf.xlu0
    %v843 = vpop.trf.xlu0
    %v844 = vpop.trf.xlu0
    %v845 = vpop.trf.xlu0
    %v846 = vpop.trf.xlu0
    %v847 = vpop.trf.xlu0
    %v848 = vpop.trf.xlu0
    %v849 = vpop.trf.xlu0
    %v850 = vpop.trf.xlu0
    %v851 = vpop.trf.xlu0
    %v852 = vpop.trf.xlu0
    %v853 = vpop.trf.xlu0
    %v854 = vpop.trf.xlu0
    %v855 = vpop.trf.xlu0
    %v856 = vpop.trf.xlu0
    %v857 = vpop.trf.xlu0
    %v859 = vsel %vm610, %v842, 0
    %v862 = vsel %vm614, %v825, 0
    %864 = vmatpush.msra.mxu0 0.0
    %865 = vmatpush.msra.mxu0 0.0
    %866 = vmatpush.msra.mxu0 0.0
    %867 = vmatpush.msra.mxu0 0.0
    %868 = vmatpush.msra.mxu0 0.0
    %869 = vmatpush.msra.mxu0 0.0
    %870 = vmatpush.msra.mxu0 0.0
    %871 = vmatpush.msra.mxu0 0.0
    %872 = vmatpush.msra.mxu0 0.0
    %873 = vmatpush.msra.mxu0 0.0
    %874 = vmatpush.msra.mxu0 0.0
    %875 = vmatpush.msra.mxu0 0.0
    %876 = vmatpush.msra.mxu0 0.0
    %877 = vmatpush.msra.mxu0 0.0
    %878 = vmatpush.msra.mxu0 0.0
    %879 = vmatpush.msra.mxu0 %v862
    %880 = vmatmul.f32.gmra.mxu0 %v859
    %v881 = vpop.f32.mrf.mxu0
    %v882 = vadd.f32 0.0, %v881
    %883 = vdwg.mxu0
    %v884 = vadd.f32 %v694, %v882
    %v885 = vld [vmem:[%s8] sm:$0x1]
    %v887 = vperm.slane %v885, 0
    %v889 = vadd.f32 %v884, %v887
    %vm890 = vcmp.gt.f32.partialorder %v889, 0.0
    %v891 = vmul.f32 %v889, 0.01
    %v892 = vsel %vm890, %v889, %v891
    %v893 = vld [vmem:[%s9] sm:$0x3]
    %v894 = vunpack.c.l.bf16 %v893
    %v895 = vld [vmem:[#allocation12] sm:$0xff]
    %v896 = vld [vmem:[#allocation12 + $0x8] sm:$0xff]
    %v897 = vld [vmem:[#allocation12 + $0x10] sm:$0xff]
    %v898 = vld [vmem:[#allocation12 + $0x18] sm:$0xff]
    %v899 = vld [vmem:[#allocation13] sm:$0xff]
    %v900 = vld [vmem:[#allocation13 + $0x8] sm:$0xff]
    %v901 = vld [vmem:[#allocation13 + $0x10] sm:$0xff]
    %v902 = vld [vmem:[#allocation13 + $0x18] sm:$0xff]
    %v904 = vsel %vm224, %v894, 0
    %906 = vmatpush.msra.mxu0 0.0
    %907 = vmatpush.msra.mxu0 0.0
    %908 = vmatpush.msra.mxu0 0.0
    %909 = vmatpush.msra.mxu0 0.0
    %910 = vmatpush.msra.mxu0 0.0
    %911 = vmatpush.msra.mxu0 0.0
    %912 = vmatpush.msra.mxu0 0.0
    %913 = vmatpush.msra.mxu0 0.0
    %914 = vmatpush.msra.mxu0 0.0
    %915 = vmatpush.msra.mxu0 0.0
    %916 = vmatpush.msra.mxu0 0.0
    %917 = vmatpush.msra.mxu0 0.0
    %918 = vmatpush.msra.mxu0 %v902
    %919 = vmatpush.msra.mxu0 %v901
    %920 = vmatpush.msra.mxu0 %v900
    %921 = vmatpush.msra.mxu0 %v899
    %922 = vmatmul.f32.gmra.mxu0 %v904
    %v923 = vpop.f32.mrf.mxu0
    %v924 = vadd.f32 0.0, %v923
    %925 = vdwg.mxu0
    %v927 = vsel %vm224, %v892, 0
    %929 = vmatpush.msra.mxu0 0.0
    %930 = vmatpush.msra.mxu0 0.0
    %931 = vmatpush.msra.mxu0 0.0
    %932 = vmatpush.msra.mxu0 0.0
    %933 = vmatpush.msra.mxu0 0.0
    %934 = vmatpush.msra.mxu0 0.0
    %935 = vmatpush.msra.mxu0 0.0
    %936 = vmatpush.msra.mxu0 0.0
    %937 = vmatpush.msra.mxu0 0.0
    %938 = vmatpush.msra.mxu0 0.0
    %939 = vmatpush.msra.mxu0 0.0
    %940 = vmatpush.msra.mxu0 0.0
    %941 = vmatpush.msra.mxu0 %v898
    %942 = vmatpush.msra.mxu0 %v897
    %943 = vmatpush.msra.mxu0 %v896
    %944 = vmatpush.msra.mxu0 %v895
    %945 = vmatmul.f32.gmra.mxu0 %v927
    %v946 = vpop.f32.mrf.mxu0
    %v947 = vadd.f32 %v924, %v946
    %948 = vdwg.mxu0
    %v949 = vld [vmem:[%s12] sm:$0x1]
    %v951 = vperm.slane %v949, 0
    %v953 = vadd.f32 %v947, %v951
    %vm954 = vcmp.gt.f32.partialorder %v953, 0.0
    %v955 = vmul.f32 %v953, 0.01
    %v956 = vsel %vm954, %v953, %v955
    %v957 = vld [vmem:[#allocation16] sm:$0xff]
    %v958 = vld [vmem:[#allocation16 + $0x8] sm:$0xff]
    %v959 = vld [vmem:[#allocation16 + $0x10] sm:$0xff]
    %v960 = vld [vmem:[#allocation16 + $0x18] sm:$0xff]
    %v961 = vld [vmem:[%s15] sm:$0x1]
    %v963 = vperm.slane %v961, 0
    %965 = vmatpush.msra.mxu0 0.0
    %966 = vmatpush.msra.mxu0 0.0
    %967 = vmatpush.msra.mxu0 0.0
    %968 = vmatpush.msra.mxu0 0.0
    %969 = vmatpush.msra.mxu0 0.0
    %970 = vmatpush.msra.mxu0 0.0
    %971 = vmatpush.msra.mxu0 0.0
    %972 = vmatpush.msra.mxu0 0.0
    %973 = vmatpush.msra.mxu0 0.0
    %974 = vmatpush.msra.mxu0 0.0
    %975 = vmatpush.msra.mxu0 0.0
    %976 = vmatpush.msra.mxu0 0.0
    %977 = vmatpush.msra.mxu0 %v960
    %978 = vmatpush.msra.mxu0 %v959
    %979 = vmatpush.msra.mxu0 %v958
    %980 = vmatpush.msra.mxu0 %v957
    %981 = vmatmul.f32.gmra.mxu0 %v927
    %v982 = vpop.f32.mrf.mxu0
    %v983 = vadd.f32 %v963, %v982
    %984 = vdwg.mxu0
    %vm985 = vcmp.gt.f32.partialorder %v983, 0.0
    %v986 = vmul.f32 %v983, 0.01
    %v987 = vsel %vm985, %v983, %v986
    %v988 = vld [vmem:[#allocation18] sm:$0xff]
    %v989 = vld [vmem:[#allocation18 + $0x8] sm:$0xff]
    %v990 = vld [vmem:[#allocation18 + $0x10] sm:$0xff]
    %v991 = vld [vmem:[#allocation18 + $0x18] sm:$0xff]
    %v992 = vld [vmem:[#allocation15] sm:$0xff]
    %v993 = vld [vmem:[#allocation15 + $0x8] sm:$0xff]
    %v994 = vld [vmem:[#allocation15 + $0x10] sm:$0xff]
    %v995 = vld [vmem:[#allocation15 + $0x18] sm:$0xff]
    %v997 = vsel %vm224, %v956, 0
    %999 = vmatpush.msra.mxu0 0.0
    %1000 = vmatpush.msra.mxu0 0.0
    %1001 = vmatpush.msra.mxu0 0.0
    %1002 = vmatpush.msra.mxu0 0.0
    %1003 = vmatpush.msra.mxu0 0.0
    %1004 = vmatpush.msra.mxu0 0.0
    %1005 = vmatpush.msra.mxu0 0.0
    %1006 = vmatpush.msra.mxu0 0.0
    %1007 = vmatpush.msra.mxu0 0.0
    %1008 = vmatpush.msra.mxu0 0.0
    %1009 = vmatpush.msra.mxu0 0.0
    %1010 = vmatpush.msra.mxu0 0.0
    %1011 = vmatpush.msra.mxu0 %v995
    %1012 = vmatpush.msra.mxu0 %v994
    %1013 = vmatpush.msra.mxu0 %v993
    %1014 = vmatpush.msra.mxu0 %v992
    %1015 = vmatmul.f32.gmra.mxu0 %v997
    %v1016 = vpop.f32.mrf.mxu0
    %v1017 = vadd.f32 0.0, %v1016
    %1018 = vdwg.mxu0
    %v1020 = vsel %vm224, %v987, 0
    %1022 = vmatpush.msra.mxu0 0.0
    %1023 = vmatpush.msra.mxu0 0.0
    %1024 = vmatpush.msra.mxu0 0.0
    %1025 = vmatpush.msra.mxu0 0.0
    %1026 = vmatpush.msra.mxu0 0.0
    %1027 = vmatpush.msra.mxu0 0.0
    %1028 = vmatpush.msra.mxu0 0.0
    %1029 = vmatpush.msra.mxu0 0.0
    %1030 = vmatpush.msra.mxu0 0.0
    %1031 = vmatpush.msra.mxu0 0.0
    %1032 = vmatpush.msra.mxu0 0.0
    %1033 = vmatpush.msra.mxu0 0.0
    %1034 = vmatpush.msra.mxu0 %v991
    %1035 = vmatpush.msra.mxu0 %v990
    %1036 = vmatpush.msra.mxu0 %v989
    %1037 = vmatpush.msra.mxu0 %v988
    %1038 = vmatmul.f32.gmra.mxu0 %v1020
    %v1039 = vpop.f32.mrf.mxu0
    %v1040 = vadd.f32 %v1017, %v1039
    %1041 = vdwg.mxu0
    %v1042 = vld [vmem:[%s17] sm:$0x1]
    %v1044 = vperm.slane %v1042, 0
    %v1046 = vadd.f32 %v1040, %v1044
    %1047 = vst [vmem:[#allocation19] sm:$0xf] %v1046
    // Predicated region
    $region110: #{tpu_custom_call.1} parent=1 // pred_check
      _
    $region111: #{tpu_custom_call.1} parent=1 // pred_check_branch
      %1049 = sbr.rel (0) target = $region113
    $region112: #{tpu_custom_call.1} parent=1 // pred_region
      %1051 = vsyncadd [#allocation6], 0
      %s1053 = sshll.u32 [#allocation19], 4
      %s1054 = int_to_ptr.vmem [resolvable:$true] %s1053
      %s1055 = sshll.u32 %s18, 4
      %s1056 = int_to_ptr.hbm [resolvable:$true] %s1055
      %1058 = dma.vmem_to_hbm [thread:$0]  %s1054, 64, %s1056, [#allocation6]
    $region113: #{tpu_custom_call.1} parent=1 // pred_fallthru
      _
    // Predicated region
    $region114: #{tpu_custom_call.1} parent=1 // pred_check
      _
    $region115: #{tpu_custom_call.1} parent=1 // pred_check_branch
      %1060 = sbr.rel (0) target = $region117
    $region116: #{tpu_custom_call.1} parent=1 // pred_region
      %1062 = dma.done [#allocation6], 64
    $region117: #{tpu_custom_call.1} parent=1 // pred_fallthru
      _
    %1063 = vsyncpa [#allocation5], 1
    %1064 = vsyncpa [#allocation8], 1
    %1065 = vsyncpa [#allocation11], 1
    %1066 = vsyncpa [#allocation14], 1
    %1067 = vsyncpa [#allocation17], 1
    %1068 = vsyncpa [#allocation6], 1
  %1069 = vsyncmov [#allocation3]
  %s1070 = vpop.sfrf %1069
  %p1071 = scmp.eq.s32.totalorder %s1070, 0
  %p1072 = pneg %p1071
  %1074 = shalt.err (%p1072)

</llo_original>
